<compile_context>
chip_gen: v7x
topology: tpu7x:2x2x1
jax: 0.10.0
libtpu: 0.0.40
codegen_flags: <defaults>
</compile_context>

<pallas_src>
import functools

import jax
import jax.numpy as jnp
from jax import lax
from jax.experimental import pallas as pl
from jax.experimental.pallas import tpu as pltpu  # noqa: F401  (TPU backend)


def _round_up(x, m):
    return ((x + m - 1) // m) * m


# --------------------------------------------------------------------------- #
# Kernel
# --------------------------------------------------------------------------- #
def _actor_kernel(x_ref, w1_ref, b1_ref, w2_ref, b2_ref, wh_ref, bh_ref,
                  out_ref, *, reparam_noise, a_pad):
    wdt = w1_ref.dtype  # bf16 weights; activations cast at the MXU input

    # fc1 + relu
    h1 = jnp.dot(x_ref[...].astype(wdt), w1_ref[...],
                 preferred_element_type=jnp.float32)
    h1 = jnp.maximum(h1 + b1_ref[...], 0.0)

    # fc2 + relu
    h2 = jnp.dot(h1.astype(wdt), w2_ref[...],
                 preferred_element_type=jnp.float32)
    h2 = jnp.maximum(h2 + b2_ref[...], 0.0)

    # fused mu|sigma head: one 2*A_pad-wide MXU pass, one dense 256-lane store
    head = jnp.dot(h2.astype(wdt), wh_ref[...],
                   preferred_element_type=jnp.float32) + bh_ref[...]

    # clamp only the sigma half (lanes >= a_pad) to [reparam_noise, 1]
    lane = lax.broadcasted_iota(jnp.int32, head.shape, 1)
    clipped = jnp.clip(head, reparam_noise, 1.0)
    out = jnp.where(lane >= a_pad, clipped, head)

    out_ref[...] = out.astype(out_ref.dtype)


# --------------------------------------------------------------------------- #
# One-time parameter preparation (padding + bf16 cast, OFF the hot path)
# --------------------------------------------------------------------------- #
def prepare_actor_params(params, *, n_actions, weight_dtype=jnp.bfloat16):
    """Pad / fuse / cast the raw f32 params once. Returns kernel-ready arrays."""
    w1, b1, w2, b2, wmu, bmu, wsig, bsig = params
    fc1_dims = w1.shape[1]
    fc2_dims = w2.shape[1]
    a_pad = _round_up(max(n_actions, 128), 128)

    # Fused head weight [Wmu | Wsig] padded to (fc2, 2*A_pad), bf16.
    w_head = jnp.zeros((fc2_dims, 2 * a_pad), weight_dtype)
    w_head = w_head.at[:, :n_actions].set(wmu.astype(weight_dtype))
    w_head = w_head.at[:, a_pad:a_pad + n_actions].set(wsig.astype(weight_dtype))

    b_head = jnp.zeros((1, 2 * a_pad), jnp.float32)
    b_head = b_head.at[0, :n_actions].set(bmu)
    b_head = b_head.at[0, a_pad:a_pad + n_actions].set(bsig)

    prepared = (
        w1.astype(weight_dtype),
        b1.reshape(1, fc1_dims).astype(jnp.float32),
        w2.astype(weight_dtype),
        b2.reshape(1, fc2_dims).astype(jnp.float32),
        w_head,
        b_head,
    )
    return jax.block_until_ready(prepared), a_pad


# --------------------------------------------------------------------------- #
# Forward wrapper
# --------------------------------------------------------------------------- #
def actor_forward(state, prepared, *, n_actions, reparam_noise=1e-6):
    """Fused ActorNetwork forward. state: (B, input_dim) f32.  Returns (mu, sigma)."""
    w1, b1, w2, b2, w_head, b_head = prepared
    B, in_dim = state.shape
    fc1_dims = w1.shape[1]
    fc2_dims = w2.shape[1]
    two_a_pad = w_head.shape[1]
    a_pad = two_a_pad // 2

    # Everything fits in VMEM -> single grid point, full blocks.
    # (block_shape == full array dims is exempt from the (8,128) rule.)
    def full(shape):
        return pl.BlockSpec(tuple(shape), lambda: (0,) * len(shape))

    flops = 2 * B * (in_dim * fc1_dims + fc1_dims * fc2_dims
                     + fc2_dims * two_a_pad)
    bytes_accessed = (
        state.size * state.dtype.itemsize
        + sum(a.size * a.dtype.itemsize for a in prepared)
        + B * two_a_pad * 4
    )

    out = pl.pallas_call(
        functools.partial(_actor_kernel, reparam_noise=reparam_noise,
                          a_pad=a_pad),
        out_shape=jax.ShapeDtypeStruct((B, two_a_pad), jnp.float32),
        in_specs=[
            full(state.shape),
            full(w1.shape), full(b1.shape),
            full(w2.shape), full(b2.shape),
            full(w_head.shape), full(b_head.shape),
        ],
        out_specs=full((B, two_a_pad)),
        cost_estimate=pl.CostEstimate(flops=flops, transcendentals=0,
                                      bytes_accessed=bytes_accessed),
    )(state, w1, b1, w2, b2, w_head, b_head)

    mu = out[:, :n_actions]
    sigma = out[:, a_pad:a_pad + n_actions]
    return mu, sigma


# --------------------------------------------------------------------------- #
# Init + references
# --------------------------------------------------------------------------- #
def init_actor_params(key, input_dim, fc1_dims=256, fc2_dims=256, n_actions=2):
    """Deterministic init mimicking nn.Linear's U(-1/sqrt(fan_in), 1/sqrt(fan_in))."""
    ks = jax.random.split(key, 8)

    def lin(kw, kb, fan_in, fan_out):
        bound = 1.0 / jnp.sqrt(jnp.float32(fan_in))
        w = jax.random.uniform(kw, (fan_in, fan_out), jnp.float32, -bound, bound)
        b = jax.random.uniform(kb, (fan_out,), jnp.float32, -bound, bound)
        return w, b

    w1, b1 = lin(ks[0], ks[1], input_dim, fc1_dims)
    w2, b2 = lin(ks[2], ks[3], fc1_dims, fc2_dims)
    wmu, bmu = lin(ks[4], ks[5], fc2_dims, n_actions)
    wsig, bsig = lin(ks[6], ks[7], fc2_dims, n_actions)
    return (w1, b1, w2, b2, wmu, bmu, wsig, bsig)


def actor_forward_ref_f32(state, params, *, reparam_noise=1e-6):
    """Pure-JAX f32 reference (matches the PyTorch module exactly)."""
    w1, b1, w2, b2, wmu, bmu, wsig, bsig = params
    h1 = jnp.maximum(state @ w1 + b1, 0.0)
    h2 = jnp.maximum(h1 @ w2 + b2, 0.0)
    mu = h2 @ wmu + bmu
    sigma = jnp.clip(h2 @ wsig + bsig, reparam_noise, 1.0)
    return mu, sigma


def actor_forward_ref_bf16(state, params, *, reparam_noise=1e-6):
    """Pure-JAX reference with the same bf16-weight / f32-accumulate recipe."""
    w1, b1, w2, b2, wmu, bmu, wsig, bsig = params
    bf = jnp.bfloat16
    h1 = jnp.dot(state.astype(bf), w1.astype(bf),
                 preferred_element_type=jnp.float32) + b1
    h1 = jnp.maximum(h1, 0.0)
    h2 = jnp.dot(h1.astype(bf), w2.astype(bf),
                 preferred_element_type=jnp.float32) + b2
    h2 = jnp.maximum(h2, 0.0)
    mu = jnp.dot(h2.astype(bf), wmu.astype(bf),
                 preferred_element_type=jnp.float32) + bmu
    sigma = jnp.dot(h2.astype(bf), wsig.astype(bf),
                    preferred_element_type=jnp.float32) + bsig
    sigma = jnp.clip(sigma, reparam_noise, 1.0)
    return mu, sigma


# TODO(synk): sample_normal (Normal rsample + tanh squash + log-prob), the Adam
# optimizer and checkpoint I/O are host/JAX-level concerns, not part of the
# fused forward kernel.

if __name__ == "__main__":
    key = jax.random.PRNGKey(0)
    k_param, k_state = jax.random.split(key)

    # Small shapes consistent with the module: input_dims=(8,), batch=2,
    # fc1=fc2=256 (module defaults), n_actions=2.
    batch, input_dim, n_actions = 2, 8, 2
    reparam_noise = 1e-6

    raw_params = init_actor_params(k_param, input_dim, fc1_dims=256,
                                   fc2_dims=256, n_actions=n_actions)
    prepared, _a_pad = prepare_actor_params(raw_params, n_actions=n_actions)

    state = jax.random.normal(k_state, (batch, input_dim), jnp.float32)

    mu, sigma = actor_forward(state, prepared, n_actions=n_actions,
                              reparam_noise=reparam_noise)
    mu, sigma = jax.block_until_ready((mu, sigma))

    # Tight check vs. a reference using the same bf16-weight recipe.
    mu_b, sigma_b = actor_forward_ref_bf16(state, raw_params,
                                           reparam_noise=reparam_noise)
    # Loose check vs. the exact f32 PyTorch-equivalent reference.
    mu_f, sigma_f = actor_forward_ref_f32(state, raw_params,
                                          reparam_noise=reparam_noise)

    assert mu.shape == (batch, n_actions) and sigma.shape == (batch, n_actions)
    assert jnp.allclose(mu, mu_b, atol=1e-4, rtol=1e-3)
    assert jnp.allclose(sigma, sigma_b, atol=1e-4, rtol=1e-3)
    assert jnp.allclose(mu, mu_f, atol=3e-2, rtol=3e-2)
    assert jnp.allclose(sigma, sigma_f, atol=3e-2, rtol=3e-2)
    assert bool(jnp.all(sigma >= reparam_noise)) and bool(jnp.all(sigma <= 1.0))

    print("KERNEL_OK")
</pallas_src>

<mosaic_0001>
module attributes {stable_mosaic.version = 11 : i64} {
  func.func @_actor_kernel(%arg0: memref<2x8xf32, #tpu.memory_space<vmem>>, %arg1: memref<8x256xbf16, #tpu.memory_space<vmem>>, %arg2: memref<1x256xf32, #tpu.memory_space<vmem>>, %arg3: memref<256x256xbf16, #tpu.memory_space<vmem>>, %arg4: memref<1x256xf32, #tpu.memory_space<vmem>>, %arg5: memref<256x256xbf16, #tpu.memory_space<vmem>>, %arg6: memref<1x256xf32, #tpu.memory_space<vmem>>, %arg7: memref<2x256xf32, #tpu.memory_space<vmem>>) attributes {dimension_semantics = [], scalar_prefetch = 0 : i64, scratch_operands = 0 : i64, tpu.core_type = #tpu.core_type<tc>} {
    %c0 = arith.constant 0 : index
    %c0_0 = arith.constant 0 : index
    %0 = vector.load %arg0[%c0, %c0_0] : memref<2x8xf32, #tpu.memory_space<vmem>>, vector<2x8xf32>
    %1 = arith.truncf %0 : vector<2x8xf32> to vector<2x8xbf16>
    %c0_1 = arith.constant 0 : index
    %c0_2 = arith.constant 0 : index
    %2 = vector.load %arg1[%c0_1, %c0_2] : memref<8x256xbf16, #tpu.memory_space<vmem>>, vector<8x256xbf16>
    %cst = arith.constant dense<0.000000e+00> : vector<2x256xf32>
    %3 = tpu.matmul %1, %2, %cst {dimension_numbers = #tpu.dot_dimension_numbers<[1], [0], [0], [1], [0, 0, 1, 1], [], []>} : vector<2x8xbf16>, vector<8x256xbf16>, vector<2x256xf32> -> vector<2x256xf32>
    %c0_3 = arith.constant 0 : index
    %c0_4 = arith.constant 0 : index
    %4 = vector.load %arg2[%c0_3, %c0_4] : memref<1x256xf32, #tpu.memory_space<vmem>>, vector<1x256xf32>
    %5 = vector.broadcast %4 : vector<1x256xf32> to vector<2x256xf32>
    %6 = arith.addf %3, %5 : vector<2x256xf32>
    %cst_5 = arith.constant 0.000000e+00 : f32
    %7 = vector.broadcast %cst_5 : f32 to vector<2x256xf32>
    %8 = arith.maximumf %6, %7 : vector<2x256xf32>
    %9 = arith.truncf %8 : vector<2x256xf32> to vector<2x256xbf16>
    %c0_6 = arith.constant 0 : index
    %c0_7 = arith.constant 0 : index
    %10 = vector.load %arg3[%c0_6, %c0_7] : memref<256x256xbf16, #tpu.memory_space<vmem>>, vector<256x256xbf16>
    %cst_8 = arith.constant dense<0.000000e+00> : vector<2x256xf32>
    %11 = tpu.matmul %9, %10, %cst_8 {dimension_numbers = #tpu.dot_dimension_numbers<[1], [0], [0], [1], [0, 0, 1, 1], [], []>} : vector<2x256xbf16>, vector<256x256xbf16>, vector<2x256xf32> -> vector<2x256xf32>
    %c0_9 = arith.constant 0 : index
    %c0_10 = arith.constant 0 : index
    %12 = vector.load %arg4[%c0_9, %c0_10] : memref<1x256xf32, #tpu.memory_space<vmem>>, vector<1x256xf32>
    %13 = vector.broadcast %12 : vector<1x256xf32> to vector<2x256xf32>
    %14 = arith.addf %11, %13 : vector<2x256xf32>
    %cst_11 = arith.constant 0.000000e+00 : f32
    %15 = vector.broadcast %cst_11 : f32 to vector<2x256xf32>
    %16 = arith.maximumf %14, %15 : vector<2x256xf32>
    %17 = arith.truncf %16 : vector<2x256xf32> to vector<2x256xbf16>
    %c0_12 = arith.constant 0 : index
    %c0_13 = arith.constant 0 : index
    %18 = vector.load %arg5[%c0_12, %c0_13] : memref<256x256xbf16, #tpu.memory_space<vmem>>, vector<256x256xbf16>
    %cst_14 = arith.constant dense<0.000000e+00> : vector<2x256xf32>
    %19 = tpu.matmul %17, %18, %cst_14 {dimension_numbers = #tpu.dot_dimension_numbers<[1], [0], [0], [1], [0, 0, 1, 1], [], []>} : vector<2x256xbf16>, vector<256x256xbf16>, vector<2x256xf32> -> vector<2x256xf32>
    %c0_15 = arith.constant 0 : index
    %c0_16 = arith.constant 0 : index
    %20 = vector.load %arg6[%c0_15, %c0_16] : memref<1x256xf32, #tpu.memory_space<vmem>>, vector<1x256xf32>
    %21 = vector.broadcast %20 : vector<1x256xf32> to vector<2x256xf32>
    %22 = arith.addf %19, %21 : vector<2x256xf32>
    %23 = tpu.iota {dimensions = array<i32: 1>} : vector<2x256xi32>
    %cst_17 = arith.constant 9.99999997E-7 : f32
    %cst_18 = arith.constant 1.000000e+00 : f32
    %24 = vector.broadcast %cst_17 : f32 to vector<2x256xf32>
    %25 = arith.maximumf %24, %22 : vector<2x256xf32>
    %26 = vector.broadcast %cst_18 : f32 to vector<2x256xf32>
    %27 = arith.minimumf %26, %25 : vector<2x256xf32>
    %c128_i32 = arith.constant 128 : i32
    %28 = vector.broadcast %c128_i32 : i32 to vector<2x256xi32>
    %29 = arith.cmpi sge, %23, %28 : vector<2x256xi32>
    %30 = arith.select %29, %27, %22 : vector<2x256xi1>, vector<2x256xf32>
    %c0_19 = arith.constant 0 : index
    %c0_20 = arith.constant 0 : index
    %31 = vector.load %arg7[%c0_19, %c0_20] : memref<2x256xf32, #tpu.memory_space<vmem>>, vector<2x256xf32>
    tpu.vector_store %arg7[%c0_19, %c0_20], %30 {strides = array<i32>} : memref<2x256xf32, #tpu.memory_space<vmem>>, vector<2x256xf32>,
    return
  }
}

</mosaic_0001>

<llo_original>
// kernel: tpu_custom_call.1
$region0: #{tpu_custom_call.1}
  #allocation0 [shape = 'u32[]', space=smem, size = 0x4, offset = 0x4, fixed_abs, tag = 'smem constant byte address 0x4 - core index']
  #allocation1 [shape = 'u32[144,128]{1,0:T(1,128)}', space=vmem, size = 0x12000, scoped, tag = 'internal scratch']
  %s0 = inlined_call_operand.hbm [shape: f32[2,8], index: 0, kind: input, shape index: {}]
  %s1 = inlined_call_operand.hbm [shape: bf16[8,256], index: 1, kind: input, shape index: {}]
  %s2 = inlined_call_operand.vmem [shape: f32[1,256], index: 2, kind: input, shape index: {}]
  %s3 = inlined_call_operand.hbm [shape: bf16[256,256], index: 3, kind: input, shape index: {}]
  %s4 = inlined_call_operand.vmem [shape: f32[1,256], index: 4, kind: input, shape index: {}]
  %s5 = inlined_call_operand.hbm [shape: bf16[256,256], index: 5, kind: input, shape index: {}]
  %s6 = inlined_call_operand.vmem [shape: f32[1,256], index: 6, kind: input, shape index: {}]
  %s7 = inlined_call_operand.hbm [shape: f32[2,256], index: 7, kind: output, shape index: {}]
  %s8 = sld [smem:[#allocation0]]
  $region54: #{tpu_custom_call.1} parent=0
    _
  %s10 = ssub.s32 1, %s8
  %s11 = scalar_select 0, %s10, %s8
  $region1: #{tpu_custom_call.1} parent=0
    #allocation2 [shape = 'u8[1024]{0}', space=vmem, size = 0x400, scoped, tag = 'input window, operand 0, single buffered']
    #allocation3 [shape = 's32[1]{0}', space=sflag, size = 0x4, scoped, tag = 'scoped memory for tpu_custom_call.1']
    #allocation4 [shape = 's32[1]{0}', space=sflag, size = 0x4, scoped, tag = 'scoped memory for tpu_custom_call.1']
    #allocation5 [shape = 'u8[4096]{0}', space=vmem, size = 0x1000, scoped, tag = 'input window, operand 1, single buffered']
    #allocation6 [shape = 's32[1]{0}', space=sflag, size = 0x4, scoped, tag = 'scoped memory for tpu_custom_call.1']
    #allocation7 [shape = 'u8[131072]{0}', space=vmem, size = 0x20000, scoped, tag = 'input window, operand 3, single buffered']
    #allocation8 [shape = 'u8[131072]{0}', space=vmem, size = 0x20000, scoped, tag = 'input window, operand 5, single buffered']
    #allocation9 [shape = 's32[1]{0}', space=sflag, size = 0x4, scoped, tag = 'scoped memory for tpu_custom_call.1']
    #allocation10 [shape = 'u8[2048]{0}', space=vmem, size = 0x800, scoped, tag = 'output window, operand 0, single buffered']
    %12 = vsyncpa [#allocation3], 0
    %13 = vsyncpa [#allocation6], 0
    %14 = vsyncpa [#allocation9], 0
    %15 = vsyncpa [#allocation4], 0
    // Predicated region
    $region2: #{tpu_custom_call.1} parent=1 // pred_check
      _
    $region3: #{tpu_custom_call.1} parent=1 // pred_check_branch
      %17 = sbr.rel (0) target = $region5
    $region4: #{tpu_custom_call.1} parent=1 // pred_region
      %s19 = ssub.s32 32, 32
      %20 = vsyncadd [#allocation3], %s19
      %s22 = sshll.u32 [#allocation2], 4
      %s23 = int_to_ptr.vmem [resolvable:$true] %s22
      %25 = dma.hbm_to_vmem [thread:$0]  %s0, 32, %s23, [#allocation3]
    $region5: #{tpu_custom_call.1} parent=1 // pred_fallthru
      _
    // Predicated region
    $region6: #{tpu_custom_call.1} parent=1 // pred_check
      _
    $region7: #{tpu_custom_call.1} parent=1 // pred_check_branch
      %27 = sbr.rel (0) target = $region9
    $region8: #{tpu_custom_call.1} parent=1 // pred_region
      %s29 = ssub.s32 128, 128
      %30 = vsyncadd [#allocation6], %s29
      %s32 = sshll.u32 [#allocation5], 4
      %s33 = int_to_ptr.vmem [resolvable:$true] %s32
      %35 = dma.hbm_to_vmem [thread:$0]  %s1, 128, %s33, [#allocation6]
    $region9: #{tpu_custom_call.1} parent=1 // pred_fallthru
      _
    // Predicated region
    $region10: #{tpu_custom_call.1} parent=1 // pred_check
      _
    $region11: #{tpu_custom_call.1} parent=1 // pred_check_branch
      %37 = sbr.rel (0) target = $region13
    $region12: #{tpu_custom_call.1} parent=1 // pred_region
      _
    $region13: #{tpu_custom_call.1} parent=1 // pred_fallthru
      _
    // Predicated region
    $region14: #{tpu_custom_call.1} parent=1 // pred_check
      _
    $region15: #{tpu_custom_call.1} parent=1 // pred_check_branch
      %39 = sbr.rel (0) target = $region17
    $region16: #{tpu_custom_call.1} parent=1 // pred_region
      %s41 = ssub.s32 4096, 4096
      %42 = vsyncadd [#allocation6], %s41
      %s43 = sshll.u32 [#allocation7], 4
      %s44 = int_to_ptr.vmem [resolvable:$true] %s43
      %49 = dma.hbm_to_vmem [thread:$0]  %s3, 4096, %s44, [#allocation6], 128, 128, 8
    $region17: #{tpu_custom_call.1} parent=1 // pred_fallthru
      _
    // Predicated region
    $region18: #{tpu_custom_call.1} parent=1 // pred_check
      _
    $region19: #{tpu_custom_call.1} parent=1 // pred_check_branch
      %51 = sbr.rel (0) target = $region21
    $region20: #{tpu_custom_call.1} parent=1 // pred_region
      _
    $region21: #{tpu_custom_call.1} parent=1 // pred_fallthru
      _
    // Predicated region
    $region22: #{tpu_custom_call.1} parent=1 // pred_check
      _
    $region23: #{tpu_custom_call.1} parent=1 // pred_check_branch
      %53 = sbr.rel (0) target = $region25
    $region24: #{tpu_custom_call.1} parent=1 // pred_region
      %s55 = ssub.s32 4096, 4096
      %56 = vsyncadd [#allocation9], %s55
      %s57 = sshll.u32 [#allocation8], 4
      %s58 = int_to_ptr.vmem [resolvable:$true] %s57
      %63 = dma.hbm_to_vmem [thread:$0]  %s5, 4096, %s58, [#allocation9], 128, 128, 8
    $region25: #{tpu_custom_call.1} parent=1 // pred_fallthru
      _
    // Predicated region
    $region26: #{tpu_custom_call.1} parent=1 // pred_check
      _
    $region27: #{tpu_custom_call.1} parent=1 // pred_check_branch
      %65 = sbr.rel (0) target = $region29
    $region28: #{tpu_custom_call.1} parent=1 // pred_region
      _
    $region29: #{tpu_custom_call.1} parent=1 // pred_fallthru
      _
    // Predicated region
    $region30: #{tpu_custom_call.1} parent=1 // pred_check
      _
    $region31: #{tpu_custom_call.1} parent=1 // pred_check_branch
      %67 = sbr.rel (0) target = $region33
    $region32: #{tpu_custom_call.1} parent=1 // pred_region
      %68 = dma.done [#allocation3], 32
    $region33: #{tpu_custom_call.1} parent=1 // pred_fallthru
      _
    // Predicated region
    $region34: #{tpu_custom_call.1} parent=1 // pred_check
      _
    $region35: #{tpu_custom_call.1} parent=1 // pred_check_branch
      %70 = sbr.rel (0) target = $region37
    $region36: #{tpu_custom_call.1} parent=1 // pred_region
      %71 = dma.done [#allocation6], 128
    $region37: #{tpu_custom_call.1} parent=1 // pred_fallthru
      _
    // Predicated region
    $region38: #{tpu_custom_call.1} parent=1 // pred_check
      _
    $region39: #{tpu_custom_call.1} parent=1 // pred_check_branch
      %73 = sbr.rel (0) target = $region41
    $region40: #{tpu_custom_call.1} parent=1 // pred_region
      %74 = dma.done [#allocation6], 4096
    $region41: #{tpu_custom_call.1} parent=1 // pred_fallthru
      _
    // Predicated region
    $region42: #{tpu_custom_call.1} parent=1 // pred_check
      _
    $region43: #{tpu_custom_call.1} parent=1 // pred_check_branch
      %76 = sbr.rel (0) target = $region45
    $region44: #{tpu_custom_call.1} parent=1 // pred_region
      %77 = dma.done [#allocation9], 4096
    $region45: #{tpu_custom_call.1} parent=1 // pred_fallthru
      _
    %v79 = vld [vmem:[#allocation2] sm:$0x3]
    %v80 = vpack.c.bf16 %v79, %v79
    %v81 = vld [vmem:[#allocation5] sm:$0xff]
    %v82 = vld [vmem:[%s2] sm:$0x3]
    %v84 = vlaneseq
    %v85 = vshrl.u32 %v84, 7
    %v86 = vsub.s32 0, %v85
    %v87 = vrot.slane %v82, %v86
    %v88 = vlaneseq
    %v89 = vshrl.u32 %v88, 7
    %v90 = vsub.s32 1, %v89
    %v91 = vrot.slane %v82, %v90
    %v95 = vunpack.c.l.b16 %v81
    %v96 = vunpack.c.h.b16 %v81
    %v97 = vpack.c.b16 %v95, %v95
    %v98 = vpack.c.b16 %v96, %v96
    %vm99 = vcmask 64512
    %v101 = vsel %vm99, %v80, 0
    %vm103 = vcmask 1043456
    %v105 = vsel %vm103, %v97, 0
    %v108 = vsel %vm103, %v98, 0
    %110 = vmatprep.subr.bf16.mxu0 %v108
    %111 = vmatpush1.bf16.msra.mxu0 %v105
    %112 = vmatprep.subr.bf16.mxu0 0
    %113 = vmatpush1.bf16.msra.mxu0 0
    %114 = vmatprep.subr.bf16.mxu0 0
    %115 = vmatpush1.bf16.msra.mxu0 0
    %116 = vmatprep.subr.bf16.mxu0 0
    %117 = vmatpush1.bf16.msra.mxu0 0
    %118 = vmatprep.subr.bf16.mxu0 0
    %119 = vmatpush1.bf16.msra.mxu0 0
    %120 = vmatprep.subr.bf16.mxu0 0
    %121 = vmatpush1.bf16.msra.mxu0 0
    %122 = vmatprep.subr.bf16.mxu0 0
    %123 = vmatpush1.bf16.msra.mxu0 0
    %124 = vmatprep.subr.bf16.mxu0 0
    %125 = vmatpush1.bf16.msra.mxu0 0
    %126 = vmatprep.subr.bf16.mxu0 0
    %127 = vmatpush1.bf16.msra.mxu0 0
    %128 = vmatprep.subr.bf16.mxu0 0
    %129 = vmatpush1.bf16.msra.mxu0 0
    %130 = vmatprep.subr.bf16.mxu0 0
    %131 = vmatpush1.bf16.msra.mxu0 0
    %132 = vmatprep.subr.bf16.mxu0 0
    %133 = vmatpush1.bf16.msra.mxu0 0
    %134 = vmatprep.subr.bf16.mxu0 0
    %135 = vmatpush1.bf16.msra.mxu0 0
    %136 = vmatprep.subr.bf16.mxu0 0
    %137 = vmatpush1.bf16.msra.mxu0 0
    %138 = vmatprep.subr.bf16.mxu0 0
    %139 = vmatpush1.bf16.msra.mxu0 0
    %140 = vmatprep.subr.bf16.mxu0 0
    %141 = vmatpush1.bf16.msra.mxu0 0
    %142 = vmatprep.mubr.bf16.mxu0 0
    %143 = vmatmul.mubr.bf16.gmra.mrb[0].mxu0 %v101
    %v144 = vpop.f32.mrb[0].mxu0
    %v145 = vadd.f32 %v87, %v144
    %v146 = vpop.f32.mrb[0].mxu0
    %v147 = vadd.f32 %v91, %v146
    %v148 = vpop.f32.mrb[0].mxu0
    %v149 = vpop.f32.mrb[0].mxu0
    %150 = vdwg.mxu0
    %v151 = vmax.f32 %v145, 0.0
    %v152 = vmax.f32 %v147, 0.0
    %v153 = vpack.c.bf16 %v151, %v151
    %v154 = vpack.c.bf16 %v152, %v152
    %v155 = vld [vmem:[#allocation7] sm:$0xff]
    %v156 = vld [vmem:[#allocation7 + $0x8] sm:$0xff]
    %v157 = vld [vmem:[#allocation7 + $0x10] sm:$0xff]
    %v158 = vld [vmem:[#allocation7 + $0x18] sm:$0xff]
    %v159 = vld [vmem:[#allocation7 + $0x20] sm:$0xff]
    %v160 = vld [vmem:[#allocation7 + $0x28] sm:$0xff]
    %v161 = vld [vmem:[#allocation7 + $0x30] sm:$0xff]
    %v162 = vld [vmem:[#allocation7 + $0x38] sm:$0xff]
    %v163 = vld [vmem:[#allocation7 + $0x40] sm:$0xff]
    %v164 = vld [vmem:[#allocation7 + $0x48] sm:$0xff]
    %v165 = vld [vmem:[#allocation7 + $0x50] sm:$0xff]
    %v166 = vld [vmem:[#allocation7 + $0x58] sm:$0xff]
    %v167 = vld [vmem:[#allocation7 + $0x60] sm:$0xff]
    %v168 = vld [vmem:[#allocation7 + $0x68] sm:$0xff]
    %v169 = vld [vmem:[#allocation7 + $0x70] sm:$0xff]
    %v170 = vld [vmem:[#allocation7 + $0x78] sm:$0xff]
    %v171 = vld [vmem:[#allocation7 + $0x80] sm:$0xff]
    %v172 = vld [vmem:[#allocation7 + $0x88] sm:$0xff]
    %v173 = vld [vmem:[#allocation7 + $0x90] sm:$0xff]
    %v174 = vld [vmem:[#allocation7 + $0x98] sm:$0xff]
    %v175 = vld [vmem:[#allocation7 + $0xa0] sm:$0xff]
    %v176 = vld [vmem:[#allocation7 + $0xa8] sm:$0xff]
    %v177 = vld [vmem:[#allocation7 + $0xb0] sm:$0xff]
    %v178 = vld [vmem:[#allocation7 + $0xb8] sm:$0xff]
    %v179 = vld [vmem:[#allocation7 + $0xc0] sm:$0xff]
    %v180 = vld [vmem:[#allocation7 + $0xc8] sm:$0xff]
    %v181 = vld [vmem:[#allocation7 + $0xd0] sm:$0xff]
    %v182 = vld [vmem:[#allocation7 + $0xd8] sm:$0xff]
    %v183 = vld [vmem:[#allocation7 + $0xe0] sm:$0xff]
    %v184 = vld [vmem:[#allocation7 + $0xe8] sm:$0xff]
    %v185 = vld [vmem:[#allocation7 + $0xf0] sm:$0xff]
    %v186 = vld [vmem:[#allocation7 + $0xf8] sm:$0xff]
    %v187 = vld [vmem:[%s4] sm:$0x3]
    %v189 = vlaneseq
    %v190 = vshrl.u32 %v189, 7
    %v191 = vsub.s32 0, %v190
    %v192 = vrot.slane %v187, %v191
    %v193 = vlaneseq
    %v194 = vshrl.u32 %v193, 7
    %v195 = vsub.s32 1, %v194
    %v196 = vrot.slane %v187, %v195
    %v231 = vunpack.c.l.b16 %v155
    %v232 = vunpack.c.h.b16 %v155
    %v233 = vunpack.c.l.b16 %v156
    %v234 = vunpack.c.h.b16 %v156
    %v235 = vunpack.c.l.b16 %v157
    %v236 = vunpack.c.h.b16 %v157
    %v237 = vunpack.c.l.b16 %v158
    %v238 = vunpack.c.h.b16 %v158
    %v239 = vunpack.c.l.b16 %v159
    %v240 = vunpack.c.h.b16 %v159
    %v241 = vunpack.c.l.b16 %v160
    %v242 = vunpack.c.h.b16 %v160
    %v243 = vunpack.c.l.b16 %v161
    %v244 = vunpack.c.h.b16 %v161
    %v245 = vunpack.c.l.b16 %v162
    %v246 = vunpack.c.h.b16 %v162
    %v247 = vunpack.c.l.b16 %v163
    %v248 = vunpack.c.h.b16 %v163
    %v249 = vunpack.c.l.b16 %v164
    %v250 = vunpack.c.h.b16 %v164
    %v251 = vunpack.c.l.b16 %v165
    %v252 = vunpack.c.h.b16 %v165
    %v253 = vunpack.c.l.b16 %v166
    %v254 = vunpack.c.h.b16 %v166
    %v255 = vunpack.c.l.b16 %v167
    %v256 = vunpack.c.h.b16 %v167
    %v257 = vunpack.c.l.b16 %v168
    %v258 = vunpack.c.h.b16 %v168
    %v259 = vunpack.c.l.b16 %v169
    %v260 = vunpack.c.h.b16 %v169
    %v261 = vunpack.c.l.b16 %v170
    %v262 = vunpack.c.h.b16 %v170
    %v263 = vunpack.c.l.b16 %v171
    %v264 = vunpack.c.h.b16 %v171
    %v265 = vunpack.c.l.b16 %v172
    %v266 = vunpack.c.h.b16 %v172
    %v267 = vunpack.c.l.b16 %v173
    %v268 = vunpack.c.h.b16 %v173
    %v269 = vunpack.c.l.b16 %v174
    %v270 = vunpack.c.h.b16 %v174
    %v271 = vunpack.c.l.b16 %v175
    %v272 = vunpack.c.h.b16 %v175
    %v273 = vunpack.c.l.b16 %v176
    %v274 = vunpack.c.h.b16 %v176
    %v275 = vunpack.c.l.b16 %v177
    %v276 = vunpack.c.h.b16 %v177
    %v277 = vunpack.c.l.b16 %v178
    %v278 = vunpack.c.h.b16 %v178
    %v279 = vunpack.c.l.b16 %v179
    %v280 = vunpack.c.h.b16 %v179
    %v281 = vunpack.c.l.b16 %v180
    %v282 = vunpack.c.h.b16 %v180
    %v283 = vunpack.c.l.b16 %v181
    %v284 = vunpack.c.h.b16 %v181
    %v285 = vunpack.c.l.b16 %v182
    %v286 = vunpack.c.h.b16 %v182
    %v287 = vunpack.c.l.b16 %v183
    %v288 = vunpack.c.h.b16 %v183
    %v289 = vunpack.c.l.b16 %v184
    %v290 = vunpack.c.h.b16 %v184
    %v291 = vunpack.c.l.b16 %v185
    %v292 = vunpack.c.h.b16 %v185
    %v293 = vunpack.c.l.b16 %v186
    %v294 = vunpack.c.h.b16 %v186
    %v295 = vpack.c.b16 %v233, %v231
    %v296 = vpack.c.b16 %v234, %v232
    %v297 = vpack.c.b16 %v237, %v235
    %v298 = vpack.c.b16 %v238, %v236
    %v299 = vpack.c.b16 %v241, %v239
    %v300 = vpack.c.b16 %v242, %v240
    %v301 = vpack.c.b16 %v245, %v243
    %v302 = vpack.c.b16 %v246, %v244
    %v303 = vpack.c.b16 %v249, %v247
    %v304 = vpack.c.b16 %v250, %v248
    %v305 = vpack.c.b16 %v253, %v251
    %v306 = vpack.c.b16 %v254, %v252
    %v307 = vpack.c.b16 %v257, %v255
    %v308 = vpack.c.b16 %v258, %v256
    %v309 = vpack.c.b16 %v261, %v259
    %v310 = vpack.c.b16 %v262, %v260
    %v311 = vpack.c.b16 %v265, %v263
    %v312 = vpack.c.b16 %v266, %v264
    %v313 = vpack.c.b16 %v269, %v267
    %v314 = vpack.c.b16 %v270, %v268
    %v315 = vpack.c.b16 %v273, %v271
    %v316 = vpack.c.b16 %v274, %v272
    %v317 = vpack.c.b16 %v277, %v275
    %v318 = vpack.c.b16 %v278, %v276
    %v319 = vpack.c.b16 %v281, %v279
    %v320 = vpack.c.b16 %v282, %v280
    %v321 = vpack.c.b16 %v285, %v283
    %v322 = vpack.c.b16 %v286, %v284
    %v323 = vpack.c.b16 %v289, %v287
    %v324 = vpack.c.b16 %v290, %v288
    %v325 = vpack.c.b16 %v293, %v291
    %v326 = vpack.c.b16 %v294, %v292
    %359 = vmatprep.subr.bf16.mxu0 %v296
    %360 = vmatpush1.bf16.msra.mxu0 %v295
    %361 = vmatprep.subr.bf16.mxu0 %v298
    %362 = vmatpush1.bf16.msra.mxu0 %v297
    %363 = vmatprep.subr.bf16.mxu0 %v300
    %364 = vmatpush1.bf16.msra.mxu0 %v299
    %365 = vmatprep.subr.bf16.mxu0 %v302
    %366 = vmatpush1.bf16.msra.mxu0 %v301
    %367 = vmatprep.subr.bf16.mxu0 %v304
    %368 = vmatpush1.bf16.msra.mxu0 %v303
    %369 = vmatprep.subr.bf16.mxu0 %v306
    %370 = vmatpush1.bf16.msra.mxu0 %v305
    %371 = vmatprep.subr.bf16.mxu0 %v308
    %372 = vmatpush1.bf16.msra.mxu0 %v307
    %373 = vmatprep.subr.bf16.mxu0 %v310
    %374 = vmatpush1.bf16.msra.mxu0 %v309
    %375 = vmatprep.subr.bf16.mxu0 %v312
    %376 = vmatpush1.bf16.msra.mxu0 %v311
    %377 = vmatprep.subr.bf16.mxu0 %v314
    %378 = vmatpush1.bf16.msra.mxu0 %v313
    %379 = vmatprep.subr.bf16.mxu0 %v316
    %380 = vmatpush1.bf16.msra.mxu0 %v315
    %381 = vmatprep.subr.bf16.mxu0 %v318
    %382 = vmatpush1.bf16.msra.mxu0 %v317
    %383 = vmatprep.subr.bf16.mxu0 %v320
    %384 = vmatpush1.bf16.msra.mxu0 %v319
    %385 = vmatprep.subr.bf16.mxu0 %v322
    %386 = vmatpush1.bf16.msra.mxu0 %v321
    %387 = vmatprep.subr.bf16.mxu0 %v324
    %388 = vmatpush1.bf16.msra.mxu0 %v323
    %389 = vmatprep.subr.bf16.mxu0 %v326
    %390 = vmatpush1.bf16.msra.mxu0 %v325
    %391 = vmatprep.mubr.bf16.mxu0 %v154
    %392 = vmatmul.mubr.bf16.gmra.mrb[0].mxu0 %v153
    %v393 = vpop.f32.mrb[0].mxu0
    %v394 = vadd.f32 %v192, %v393
    %v395 = vpop.f32.mrb[0].mxu0
    %v396 = vadd.f32 %v196, %v395
    %v397 = vpop.f32.mrb[0].mxu0
    %v398 = vpop.f32.mrb[0].mxu0
    %399 = vdwg.mxu0
    %v400 = vmax.f32 %v394, 0.0
    %v401 = vmax.f32 %v396, 0.0
    %v402 = vpack.c.bf16 %v400, %v400
    %v403 = vpack.c.bf16 %v401, %v401
    %v404 = vld [vmem:[#allocation8] sm:$0xff]
    %v405 = vld [vmem:[#allocation8 + $0x8] sm:$0xff]
    %v406 = vld [vmem:[#allocation8 + $0x10] sm:$0xff]
    %v407 = vld [vmem:[#allocation8 + $0x18] sm:$0xff]
    %v408 = vld [vmem:[#allocation8 + $0x20] sm:$0xff]
    %v409 = vld [vmem:[#allocation8 + $0x28] sm:$0xff]
    %v410 = vld [vmem:[#allocation8 + $0x30] sm:$0xff]
    %v411 = vld [vmem:[#allocation8 + $0x38] sm:$0xff]
    %v412 = vld [vmem:[#allocation8 + $0x40] sm:$0xff]
    %v413 = vld [vmem:[#allocation8 + $0x48] sm:$0xff]
    %v414 = vld [vmem:[#allocation8 + $0x50] sm:$0xff]
    %v415 = vld [vmem:[#allocation8 + $0x58] sm:$0xff]
    %v416 = vld [vmem:[#allocation8 + $0x60] sm:$0xff]
    %v417 = vld [vmem:[#allocation8 + $0x68] sm:$0xff]
    %v418 = vld [vmem:[#allocation8 + $0x70] sm:$0xff]
    %v419 = vld [vmem:[#allocation8 + $0x78] sm:$0xff]
    %v420 = vld [vmem:[#allocation8 + $0x80] sm:$0xff]
    %v421 = vld [vmem:[#allocation8 + $0x88] sm:$0xff]
    %v422 = vld [vmem:[#allocation8 + $0x90] sm:$0xff]
    %v423 = vld [vmem:[#allocation8 + $0x98] sm:$0xff]
    %v424 = vld [vmem:[#allocation8 + $0xa0] sm:$0xff]
    %v425 = vld [vmem:[#allocation8 + $0xa8] sm:$0xff]
    %v426 = vld [vmem:[#allocation8 + $0xb0] sm:$0xff]
    %v427 = vld [vmem:[#allocation8 + $0xb8] sm:$0xff]
    %v428 = vld [vmem:[#allocation8 + $0xc0] sm:$0xff]
    %v429 = vld [vmem:[#allocation8 + $0xc8] sm:$0xff]
    %v430 = vld [vmem:[#allocation8 + $0xd0] sm:$0xff]
    %v431 = vld [vmem:[#allocation8 + $0xd8] sm:$0xff]
    %v432 = vld [vmem:[#allocation8 + $0xe0] sm:$0xff]
    %v433 = vld [vmem:[#allocation8 + $0xe8] sm:$0xff]
    %v434 = vld [vmem:[#allocation8 + $0xf0] sm:$0xff]
    %v435 = vld [vmem:[#allocation8 + $0xf8] sm:$0xff]
    %v436 = vld [vmem:[%s6] sm:$0x3]
    %v438 = vlaneseq
    %v439 = vshrl.u32 %v438, 7
    %v440 = vsub.s32 0, %v439
    %v441 = vrot.slane %v436, %v440
    %v442 = vlaneseq
    %v443 = vshrl.u32 %v442, 7
    %v444 = vsub.s32 1, %v443
    %v445 = vrot.slane %v436, %v444
    %v480 = vunpack.c.l.b16 %v404
    %v481 = vunpack.c.h.b16 %v404
    %v482 = vunpack.c.l.b16 %v405
    %v483 = vunpack.c.h.b16 %v405
    %v484 = vunpack.c.l.b16 %v406
    %v485 = vunpack.c.h.b16 %v406
    %v486 = vunpack.c.l.b16 %v407
    %v487 = vunpack.c.h.b16 %v407
    %v488 = vunpack.c.l.b16 %v408
    %v489 = vunpack.c.h.b16 %v408
    %v490 = vunpack.c.l.b16 %v409
    %v491 = vunpack.c.h.b16 %v409
    %v492 = vunpack.c.l.b16 %v410
    %v493 = vunpack.c.h.b16 %v410
    %v494 = vunpack.c.l.b16 %v411
    %v495 = vunpack.c.h.b16 %v411
    %v496 = vunpack.c.l.b16 %v412
    %v497 = vunpack.c.h.b16 %v412
    %v498 = vunpack.c.l.b16 %v413
    %v499 = vunpack.c.h.b16 %v413
    %v500 = vunpack.c.l.b16 %v414
    %v501 = vunpack.c.h.b16 %v414
    %v502 = vunpack.c.l.b16 %v415
    %v503 = vunpack.c.h.b16 %v415
    %v504 = vunpack.c.l.b16 %v416
    %v505 = vunpack.c.h.b16 %v416
    %v506 = vunpack.c.l.b16 %v417
    %v507 = vunpack.c.h.b16 %v417
    %v508 = vunpack.c.l.b16 %v418
    %v509 = vunpack.c.h.b16 %v418
    %v510 = vunpack.c.l.b16 %v419
    %v511 = vunpack.c.h.b16 %v419
    %v512 = vunpack.c.l.b16 %v420
    %v513 = vunpack.c.h.b16 %v420
    %v514 = vunpack.c.l.b16 %v421
    %v515 = vunpack.c.h.b16 %v421
    %v516 = vunpack.c.l.b16 %v422
    %v517 = vunpack.c.h.b16 %v422
    %v518 = vunpack.c.l.b16 %v423
    %v519 = vunpack.c.h.b16 %v423
    %v520 = vunpack.c.l.b16 %v424
    %v521 = vunpack.c.h.b16 %v424
    %v522 = vunpack.c.l.b16 %v425
    %v523 = vunpack.c.h.b16 %v425
    %v524 = vunpack.c.l.b16 %v426
    %v525 = vunpack.c.h.b16 %v426
    %v526 = vunpack.c.l.b16 %v427
    %v527 = vunpack.c.h.b16 %v427
    %v528 = vunpack.c.l.b16 %v428
    %v529 = vunpack.c.h.b16 %v428
    %v530 = vunpack.c.l.b16 %v429
    %v531 = vunpack.c.h.b16 %v429
    %v532 = vunpack.c.l.b16 %v430
    %v533 = vunpack.c.h.b16 %v430
    %v534 = vunpack.c.l.b16 %v431
    %v535 = vunpack.c.h.b16 %v431
    %v536 = vunpack.c.l.b16 %v432
    %v537 = vunpack.c.h.b16 %v432
    %v538 = vunpack.c.l.b16 %v433
    %v539 = vunpack.c.h.b16 %v433
    %v540 = vunpack.c.l.b16 %v434
    %v541 = vunpack.c.h.b16 %v434
    %v542 = vunpack.c.l.b16 %v435
    %v543 = vunpack.c.h.b16 %v435
    %v544 = vpack.c.b16 %v482, %v480
    %v545 = vpack.c.b16 %v483, %v481
    %v546 = vpack.c.b16 %v486, %v484
    %v547 = vpack.c.b16 %v487, %v485
    %v548 = vpack.c.b16 %v490, %v488
    %v549 = vpack.c.b16 %v491, %v489
    %v550 = vpack.c.b16 %v494, %v492
    %v551 = vpack.c.b16 %v495, %v493
    %v552 = vpack.c.b16 %v498, %v496
    %v553 = vpack.c.b16 %v499, %v497
    %v554 = vpack.c.b16 %v502, %v500
    %v555 = vpack.c.b16 %v503, %v501
    %v556 = vpack.c.b16 %v506, %v504
    %v557 = vpack.c.b16 %v507, %v505
    %v558 = vpack.c.b16 %v510, %v508
    %v559 = vpack.c.b16 %v511, %v509
    %v560 = vpack.c.b16 %v514, %v512
    %v561 = vpack.c.b16 %v515, %v513
    %v562 = vpack.c.b16 %v518, %v516
    %v563 = vpack.c.b16 %v519, %v517
    %v564 = vpack.c.b16 %v522, %v520
    %v565 = vpack.c.b16 %v523, %v521
    %v566 = vpack.c.b16 %v526, %v524
    %v567 = vpack.c.b16 %v527, %v525
    %v568 = vpack.c.b16 %v530, %v528
    %v569 = vpack.c.b16 %v531, %v529
    %v570 = vpack.c.b16 %v534, %v532
    %v571 = vpack.c.b16 %v535, %v533
    %v572 = vpack.c.b16 %v538, %v536
    %v573 = vpack.c.b16 %v539, %v537
    %v574 = vpack.c.b16 %v542, %v540
    %v575 = vpack.c.b16 %v543, %v541
    %608 = vmatprep.subr.bf16.mxu0 %v545
    %609 = vmatpush1.bf16.msra.mxu0 %v544
    %610 = vmatprep.subr.bf16.mxu0 %v547
    %611 = vmatpush1.bf16.msra.mxu0 %v546
    %612 = vmatprep.subr.bf16.mxu0 %v549
    %613 = vmatpush1.bf16.msra.mxu0 %v548
    %614 = vmatprep.subr.bf16.mxu0 %v551
    %615 = vmatpush1.bf16.msra.mxu0 %v550
    %616 = vmatprep.subr.bf16.mxu0 %v553
    %617 = vmatpush1.bf16.msra.mxu0 %v552
    %618 = vmatprep.subr.bf16.mxu0 %v555
    %619 = vmatpush1.bf16.msra.mxu0 %v554
    %620 = vmatprep.subr.bf16.mxu0 %v557
    %621 = vmatpush1.bf16.msra.mxu0 %v556
    %622 = vmatprep.subr.bf16.mxu0 %v559
    %623 = vmatpush1.bf16.msra.mxu0 %v558
    %624 = vmatprep.subr.bf16.mxu0 %v561
    %625 = vmatpush1.bf16.msra.mxu0 %v560
    %626 = vmatprep.subr.bf16.mxu0 %v563
    %627 = vmatpush1.bf16.msra.mxu0 %v562
    %628 = vmatprep.subr.bf16.mxu0 %v565
    %629 = vmatpush1.bf16.msra.mxu0 %v564
    %630 = vmatprep.subr.bf16.mxu0 %v567
    %631 = vmatpush1.bf16.msra.mxu0 %v566
    %632 = vmatprep.subr.bf16.mxu0 %v569
    %633 = vmatpush1.bf16.msra.mxu0 %v568
    %634 = vmatprep.subr.bf16.mxu0 %v571
    %635 = vmatpush1.bf16.msra.mxu0 %v570
    %636 = vmatprep.subr.bf16.mxu0 %v573
    %637 = vmatpush1.bf16.msra.mxu0 %v572
    %638 = vmatprep.subr.bf16.mxu0 %v575
    %639 = vmatpush1.bf16.msra.mxu0 %v574
    %640 = vmatprep.mubr.bf16.mxu0 %v403
    %641 = vmatmul.mubr.bf16.gmra.mrb[0].mxu0 %v402
    %v642 = vpop.f32.mrb[0].mxu0
    %v643 = vadd.f32 %v441, %v642
    %v644 = vpop.f32.mrb[0].mxu0
    %v645 = vadd.f32 %v445, %v644
    %v646 = vpop.f32.mrb[0].mxu0
    %v647 = vpop.f32.mrb[0].mxu0
    %648 = vdwg.mxu0
    %v649 = vlaneseq
    %v650 = vand.u32 %v649, 127
    %v651 = vadd.s32 %v650, 128
    %v652 = vmax.f32 %v643, 1e-06
    %v653 = vmax.f32 %v645, 1e-06
    %v654 = vmin.f32 %v652, 1.0
    %v655 = vmin.f32 %v653, 1.0
    %vm656 = vcmp.ge.s32.totalorder %v650, 128
    %vm657 = vcmp.ge.s32.totalorder %v651, 128
    %v658 = vsel %vm656, %v654, %v643
    %v659 = vsel %vm657, %v655, %v645
    %v662 = vcombine.low %v658, %v659
    %v664 = vunpack.c.l.s4 1983009808
    %v665 = vunpack.c.0.s8 %v664
    %v666 = vlaneseq
    %v667 = vshrl.u32 %v666, 7
    %v668 = vsub.s32 %v665, %v667
    %v669 = vrot.slane %v662, %v668
    %671 = vst [vmem:[#allocation10] sm:$0xf] %v669
    // Predicated region
    $region46: #{tpu_custom_call.1} parent=1 // pred_check
      _
    $region47: #{tpu_custom_call.1} parent=1 // pred_check_branch
      %673 = sbr.rel (0) target = $region49
    $region48: #{tpu_custom_call.1} parent=1 // pred_region
      %s675 = ssub.s32 64, 64
      %676 = vsyncadd [#allocation4], %s675
      %s678 = sshll.u32 [#allocation10], 4
      %s679 = int_to_ptr.vmem [resolvable:$true] %s678
      %681 = dma.vmem_to_hbm [thread:$0]  %s679, 64, %s7, [#allocation4]
    $region49: #{tpu_custom_call.1} parent=1 // pred_fallthru
      _
    // Predicated region
    $region50: #{tpu_custom_call.1} parent=1 // pred_check
      _
    $region51: #{tpu_custom_call.1} parent=1 // pred_check_branch
      %683 = sbr.rel (0) target = $region53
    $region52: #{tpu_custom_call.1} parent=1 // pred_region
      %684 = dma.done [#allocation4], 64
    $region53: #{tpu_custom_call.1} parent=1 // pred_fallthru
      _
    %685 = vsyncpa [#allocation3], 1
    %686 = vsyncpa [#allocation6], 1
    %687 = vsyncpa [#allocation9], 1
    %688 = vsyncpa [#allocation4], 1

</llo_original>
